<compile_context>
chip_gen: v7x
topology: tpu7x:2x2x1
jax: 0.10.0
libtpu: 0.0.40
codegen_flags: <defaults>
</compile_context>

<pallas_src>
import functools

import jax
import jax.numpy as jnp
from jax.experimental import pallas as pl
from jax.experimental.pallas import tpu as pltpu

LANE = 128
SUBLANE = 8
SENTINEL = -1e9   # lane-pad logit: sigmoid -> 0, stable-BCE term -> 0 (finite, no NaN)


def _cdiv(a, b):
    return -(-a // b)


def _round_up(a, b):
    return _cdiv(a, b) * b


def _chip_config():
    """Returns (block-row cap, megacore splits, is_v7x) per TPU generation."""
    kind = jax.devices()[0].device_kind.lower().replace(" ", "")
    if "v7" in kind or "tpu7" in kind:
        # 2 TCs + ~3.2 TB/s HBM: biggest tiles + core-parallel split pay off most.
        return 8192, 2, True
    if "v5lite" in kind or "v5e" in kind:
        # v5e default scoped VMEM is 16 MiB; keep double-buffered inputs well under.
        return 2048, 1, False
    return 4096, 1, False


def _combined_loss_kernel(x_ref, t_ref, part_ref, *, rows_total):
    s = pl.program_id(0)
    i = pl.program_id(1)
    block_rows = x_ref.shape[0]

    @pl.when(i == 0)
    def _init():
        part_ref[...] = jnp.zeros_like(part_ref)

    x = x_ref[...].astype(jnp.float32)
    t = t_ref[...].astype(jnp.float32)

    # One transcendental per element: e = exp(-|x|), shared between the
    # numerically stable BCE log-term and sigmoid.
    e = jnp.exp(-jnp.abs(x))
    one_plus_e = 1.0 + e
    # BCEWithLogits: max(x,0) - x*t + log(1 + exp(-|x|)).
    bce = jnp.maximum(x, 0.0) - x * t + jnp.log(one_plus_e)
    # sigmoid(x) reusing (1+e); approx reciprocal lands on the EUP slot (VALU-free).
    inv = pl.reciprocal(one_plus_e, approx=True)
    probs = jnp.where(x >= 0.0, inv, e * inv)

    pt = probs * t
    ppt = probs + t

    def _red(v):
        # (block_rows, 128) -> (8, 128): one VALU add per input vreg, no XLU.
        return jnp.sum(v.reshape(-1, SUBLANE, LANE), axis=0)

    # Unclamped logical block id (the DMA index_map clamps; the mask must not,
    # so a clamped "phantom" block contributes exactly zero).
    block = s * pl.num_programs(1) + i
    row_start = block * block_rows

    @pl.when(row_start + block_rows <= rows_total)
    def _acc_full():   # fast path: every row of this tile is valid, no mask.
        part_ref[0, 0] += _red(bce)        # sum of per-element BCE terms
        part_ref[0, 1] += _red(pt)         # dice intersection: sum p*t
        part_ref[0, 2] += _red(ppt)        # dice denominator:  sum p + sum t

    @pl.when(row_start + block_rows > rows_total)
    def _acc_tail():   # at most one partial / phantom tile: mask OOB rows.
        rid = jax.lax.broadcasted_iota(jnp.int32, (block_rows, LANE), 0)
        valid = (row_start + rid) < rows_total
        part_ref[0, 0] += _red(jnp.where(valid, bce, 0.0))
        part_ref[0, 1] += _red(jnp.where(valid, pt, 0.0))
        part_ref[0, 2] += _red(jnp.where(valid, ppt, 0.0))


def combined_loss(logits, targets, *, bce_weight=0.5, dice_weight=0.5,
                  smooth=1e-6):
    assert logits.shape == targets.shape
    n = int(logits.size)
    rows = _cdiv(n, LANE)

    # Keep native dtypes (bf16 logits halve HBM read bytes of this purely
    # bandwidth-bound kernel).  When numel % 128 == 0 the reshape is a pure
    # metadata change: no pad, no extra HBM pass.
    flat_x = logits.reshape(-1)
    flat_t = targets.reshape(-1)
    lane_pad = rows * LANE - n
    if lane_pad:
        # Rare (< 128 elements, only when numel % 128 != 0).  Sentinel logit /
        # zero target contribute exactly 0 to all three partial sums.
        flat_x = jnp.pad(flat_x, (0, lane_pad), constant_values=SENTINEL)
        flat_t = jnp.pad(flat_t, (0, lane_pad), constant_values=0)
    x2 = flat_x.reshape(rows, LANE)
    t2 = flat_t.reshape(rows, LANE)

    cap_rows, num_splits, is_v7x = _chip_config()
    block_rows = min(cap_rows, _round_up(rows, SUBLANE))
    n_blocks = _cdiv(rows, block_rows)
    blocks_per_split = _cdiv(n_blocks, num_splits)
    last_block = n_blocks - 1

    def _in_map(s, i):
        # Clamp so the (at most one) phantom block of an odd split re-reads the
        # last real block instead of issuing a fully out-of-bounds DMA; the
        # kernel's (unclamped) row mask zeroes its contribution.
        return (jnp.minimum(s * blocks_per_split + i, last_block), 0)

    if num_splits > 1 and is_v7x:
        # TODO(synk): verify on xprof that both v7x TensorCores engage; plain
        # "parallel" is the fallback if CORE_PARALLEL is unavailable.
        dim_sem = (getattr(pltpu, "CORE_PARALLEL", "parallel"), "arbitrary")
    else:
        dim_sem = ("arbitrary", "arbitrary")

    # Double-buffered inputs + headroom; stays under scoped/physical VMEM caps.
    in_block_bytes = block_rows * LANE * (x2.dtype.itemsize + t2.dtype.itemsize)
    vmem_limit = int(min(max(3 * in_block_bytes + (4 << 20), 16 << 20), 48 << 20))

    partials = pl.pallas_call(
        functools.partial(_combined_loss_kernel, rows_total=rows),
        out_shape=jax.ShapeDtypeStruct((num_splits, 3, SUBLANE, LANE),
                                       jnp.float32),
        grid_spec=pltpu.PrefetchScalarGridSpec(
            num_scalar_prefetch=0,
            grid=(num_splits, blocks_per_split),
            in_specs=[
                pl.BlockSpec((block_rows, LANE), _in_map),
                pl.BlockSpec((block_rows, LANE), _in_map),
            ],
            out_specs=pl.BlockSpec((1, 3, SUBLANE, LANE),
                                   lambda s, i: (s, 0, 0, 0)),
        ),
        compiler_params=pltpu.CompilerParams(
            dimension_semantics=dim_sem,
            vmem_limit_bytes=vmem_limit),
    )(x2, t2)

    # Tiny final reduction + scalar math in the surrounding XLA graph.
    sums = jnp.sum(partials, axis=(0, 2, 3))   # [sum bce, sum p*t, sum p + sum t]
    bce_mean = sums[0] / jnp.float32(n)
    dice_coeff = (2.0 * sums[1] + smooth) / (sums[2] + smooth)
    return bce_weight * bce_mean + dice_weight * (1.0 - dice_coeff)


def _reference(logits, targets, bce_weight=0.5, dice_weight=0.5, smooth=1e-6):
    x = logits.astype(jnp.float32)
    t = targets.astype(jnp.float32)
    bce = jnp.mean(jnp.maximum(x, 0.0) - x * t + jnp.log1p(jnp.exp(-jnp.abs(x))))
    p = jax.nn.sigmoid(x)
    inter = jnp.sum(p * t)
    dice = (2.0 * inter + smooth) / (jnp.sum(p) + jnp.sum(t) + smooth)
    return bce_weight * bce + dice_weight * (1.0 - dice)


if __name__ == "__main__":
    key = jax.random.PRNGKey(0)

    def _check(shape, dtype=jnp.float32, seed_split=0):
        k1, k2 = jax.random.split(jax.random.fold_in(key, seed_split))
        logits = jax.random.normal(k1, shape, dtype=jnp.float32).astype(dtype)
        targets = (jax.random.uniform(k2, shape) > 0.5).astype(jnp.float32)
        out = jax.block_until_ready(combined_loss(logits, targets))
        ref = _reference(logits, targets)
        # Tolerance loosened (approx EUP reciprocal in sigmoid, log(1+e) vs log1p).
        assert jnp.allclose(out, ref, rtol=2e-3, atol=2e-3), (shape, out, ref)

    # Lane-aligned NCHW case (no padding, single full block).
    _check((2, 4, 16, 16), seed_split=0)
    # Row count not a multiple of 8 -> exercises the partial-block tail mask.
    _check((3, 5, 24, 16), seed_split=1)
    # numel not a multiple of 128 -> exercises the (rare) sentinel lane pad + mask.
    _check((7, 3, 5, 5), seed_split=2)
    # bf16 logits streamed in native dtype (halves HBM read bytes).
    _check((2, 4, 16, 16), dtype=jnp.bfloat16, seed_split=3)

    print("KERNEL_OK")
</pallas_src>

<mosaic_0001>
module attributes {stable_mosaic.version = 11 : i64} {
  func.func @_combined_loss_kernel(%arg0: i32, %arg1: i32, %arg2: memref<16x128xf32, #tpu.memory_space<vmem>>, %arg3: memref<16x128xf32, #tpu.memory_space<vmem>>, %arg4: memref<1x3x8x128xf32, #tpu.memory_space<vmem>>) attributes {dimension_semantics = [#tpu.dimension_semantics<arbitrary>, #tpu.dimension_semantics<arbitrary>], iteration_bounds = array<i64: 1, 1>, scalar_prefetch = 0 : i64, scratch_operands = 0 : i64, tpu.core_type = #tpu.core_type<tc>, window_params = [{transform_indices = @transform_0, window_bounds = array<i64: 16, 128>}, {transform_indices = @transform_1, window_bounds = array<i64: 16, 128>}, {transform_indices = @transform_2, window_bounds = array<i64: 1, 3, 8, 128>}]} {
    %c0_i32 = arith.constant 0 : i32
    %0 = arith.cmpi eq, %arg1, %c0_i32 : i32
    %1 = arith.extui %0 : i1 to i32
    %c0_i32_0 = arith.constant 0 : i32
    %2 = arith.cmpi ne, %1, %c0_i32_0 : i32
    scf.if %2 {
      %cst_13 = arith.constant 0.000000e+00 : f32
      %35 = vector.broadcast %cst_13 : f32 to vector<1x3x8x128xf32>
      %c0_14 = arith.constant 0 : index
      %c0_15 = arith.constant 0 : index
      %c0_16 = arith.constant 0 : index
      %c0_17 = arith.constant 0 : index
      %36 = vector.load %arg4[%c0_14, %c0_15, %c0_16, %c0_17] : memref<1x3x8x128xf32, #tpu.memory_space<vmem>>, vector<1x3x8x128xf32>
      tpu.vector_store %arg4[%c0_14, %c0_15, %c0_16, %c0_17], %35 {strides = array<i32>} : memref<1x3x8x128xf32, #tpu.memory_space<vmem>>, vector<1x3x8x128xf32>,
    } else {
    }
    %c0 = arith.constant 0 : index
    %c0_1 = arith.constant 0 : index
    %3 = vector.load %arg2[%c0, %c0_1] : memref<16x128xf32, #tpu.memory_space<vmem>>, vector<16x128xf32>
    %c0_2 = arith.constant 0 : index
    %c0_3 = arith.constant 0 : index
    %4 = vector.load %arg3[%c0_2, %c0_3] : memref<16x128xf32, #tpu.memory_space<vmem>>, vector<16x128xf32>
    %5 = math.absf %3 : vector<16x128xf32>
    %cst = arith.constant 0.000000e+00 : f32
    %6 = vector.broadcast %cst : f32 to vector<16x128xf32>
    %7 = arith.subf %6, %5 : vector<16x128xf32>
    %8 = math.exp %7 : vector<16x128xf32>
    %cst_4 = arith.constant 1.000000e+00 : f32
    %9 = vector.broadcast %cst_4 : f32 to vector<16x128xf32>
    %10 = arith.addf %9, %8 : vector<16x128xf32>
    %cst_5 = arith.constant 0.000000e+00 : f32
    %11 = vector.broadcast %cst_5 : f32 to vector<16x128xf32>
    %12 = arith.maximumf %3, %11 : vector<16x128xf32>
    %13 = arith.mulf %3, %4 : vector<16x128xf32>
    %14 = arith.subf %12, %13 : vector<16x128xf32>
    %15 = math.log %10 : vector<16x128xf32>
    %16 = arith.addf %14, %15 : vector<16x128xf32>
    %17 = tpu.reciprocal %10 {approx = true} : vector<16x128xf32> -> vector<16x128xf32>
    %cst_6 = arith.constant 0.000000e+00 : f32
    %18 = vector.broadcast %cst_6 : f32 to vector<16x128xf32>
    %19 = arith.cmpf oge, %3, %18 : vector<16x128xf32>
    %20 = arith.mulf %8, %17 : vector<16x128xf32>
    %21 = arith.select %19, %17, %20 : vector<16x128xi1>, vector<16x128xf32>
    %22 = arith.mulf %21, %4 : vector<16x128xf32>
    %23 = arith.addf %21, %4 : vector<16x128xf32>
    %c1_i32 = arith.constant 1 : i32
    %24 = arith.muli %arg0, %c1_i32 : i32
    %25 = arith.addi %24, %arg1 : i32
    %c16_i32 = arith.constant 16 : i32
    %26 = arith.muli %25, %c16_i32 : i32
    %c16_i32_7 = arith.constant 16 : i32
    %27 = arith.addi %26, %c16_i32_7 : i32
    %c16_i32_8 = arith.constant 16 : i32
    %28 = arith.cmpi sle, %27, %c16_i32_8 : i32
    %29 = arith.extui %28 : i1 to i32
    %c0_i32_9 = arith.constant 0 : i32
    %30 = arith.cmpi ne, %29, %c0_i32_9 : i32
    scf.if %30 {
      %c0_13 = arith.constant 0 : index
      %c0_14 = arith.constant 0 : index
      %c0_15 = arith.constant 0 : index
      %c0_16 = arith.constant 0 : index
      %35 = vector.load %arg4[%c0_13, %c0_14, %c0_15, %c0_16] : memref<1x3x8x128xf32, #tpu.memory_space<vmem>>, vector<1x1x8x128xf32>
      %36 = vector.shape_cast %35 : vector<1x1x8x128xf32> to vector<8x128xf32>
      %37 = vector.shape_cast %16 : vector<16x128xf32> to vector<2x8x128xf32>
      %cst_17 = arith.constant dense<0.000000e+00> : vector<8x128xf32>
      %38 = vector.multi_reduction <add>, %37, %cst_17 [0] : vector<2x8x128xf32> to vector<8x128xf32>
      %39 = arith.addf %36, %38 : vector<8x128xf32>
      %c0_18 = arith.constant 0 : index
      %c0_19 = arith.constant 0 : index
      %c0_20 = arith.constant 0 : index
      %c0_21 = arith.constant 0 : index
      %40 = vector.load %arg4[%c0_18, %c0_19, %c0_20, %c0_21] : memref<1x3x8x128xf32, #tpu.memory_space<vmem>>, vector<1x1x8x128xf32>
      %41 = vector.shape_cast %40 : vector<1x1x8x128xf32> to vector<8x128xf32>
      %42 = vector.shape_cast %39 : vector<8x128xf32> to vector<1x1x8x128xf32>
      tpu.vector_store %arg4[%c0_18, %c0_19, %c0_20, %c0_21], %42 {strides = array<i32>} : memref<1x3x8x128xf32, #tpu.memory_space<vmem>>, vector<1x1x8x128xf32>,
      %c0_22 = arith.constant 0 : index
      %c1 = arith.constant 1 : index
      %c0_23 = arith.constant 0 : index
      %c0_24 = arith.constant 0 : index
      %43 = vector.load %arg4[%c0_22, %c1, %c0_23, %c0_24] : memref<1x3x8x128xf32, #tpu.memory_space<vmem>>, vector<1x1x8x128xf32>
      %44 = vector.shape_cast %43 : vector<1x1x8x128xf32> to vector<8x128xf32>
      %45 = vector.shape_cast %22 : vector<16x128xf32> to vector<2x8x128xf32>
      %cst_25 = arith.constant dense<0.000000e+00> : vector<8x128xf32>
      %46 = vector.multi_reduction <add>, %45, %cst_25 [0] : vector<2x8x128xf32> to vector<8x128xf32>
      %47 = arith.addf %44, %46 : vector<8x128xf32>
      %c0_26 = arith.constant 0 : index
      %c1_27 = arith.constant 1 : index
      %c0_28 = arith.constant 0 : index
      %c0_29 = arith.constant 0 : index
      %48 = vector.load %arg4[%c0_26, %c1_27, %c0_28, %c0_29] : memref<1x3x8x128xf32, #tpu.memory_space<vmem>>, vector<1x1x8x128xf32>
      %49 = vector.shape_cast %48 : vector<1x1x8x128xf32> to vector<8x128xf32>
      %50 = vector.shape_cast %47 : vector<8x128xf32> to vector<1x1x8x128xf32>
      tpu.vector_store %arg4[%c0_26, %c1_27, %c0_28, %c0_29], %50 {strides = array<i32>} : memref<1x3x8x128xf32, #tpu.memory_space<vmem>>, vector<1x1x8x128xf32>,
      %c0_30 = arith.constant 0 : index
      %c2 = arith.constant 2 : index
      %c0_31 = arith.constant 0 : index
      %c0_32 = arith.constant 0 : index
      %51 = vector.load %arg4[%c0_30, %c2, %c0_31, %c0_32] : memref<1x3x8x128xf32, #tpu.memory_space<vmem>>, vector<1x1x8x128xf32>
      %52 = vector.shape_cast %51 : vector<1x1x8x128xf32> to vector<8x128xf32>
      %53 = vector.shape_cast %23 : vector<16x128xf32> to vector<2x8x128xf32>
      %cst_33 = arith.constant dense<0.000000e+00> : vector<8x128xf32>
      %54 = vector.multi_reduction <add>, %53, %cst_33 [0] : vector<2x8x128xf32> to vector<8x128xf32>
      %55 = arith.addf %52, %54 : vector<8x128xf32>
      %c0_34 = arith.constant 0 : index
      %c2_35 = arith.constant 2 : index
      %c0_36 = arith.constant 0 : index
      %c0_37 = arith.constant 0 : index
      %56 = vector.load %arg4[%c0_34, %c2_35, %c0_36, %c0_37] : memref<1x3x8x128xf32, #tpu.memory_space<vmem>>, vector<1x1x8x128xf32>
      %57 = vector.shape_cast %56 : vector<1x1x8x128xf32> to vector<8x128xf32>
      %58 = vector.shape_cast %55 : vector<8x128xf32> to vector<1x1x8x128xf32>
      tpu.vector_store %arg4[%c0_34, %c2_35, %c0_36, %c0_37], %58 {strides = array<i32>} : memref<1x3x8x128xf32, #tpu.memory_space<vmem>>, vector<1x1x8x128xf32>,
    } else {
    }
    %c16_i32_10 = arith.constant 16 : i32
    %31 = arith.addi %26, %c16_i32_10 : i32
    %c16_i32_11 = arith.constant 16 : i32
    %32 = arith.cmpi sgt, %31, %c16_i32_11 : i32
    %33 = arith.extui %32 : i1 to i32
    %c0_i32_12 = arith.constant 0 : i32
    %34 = arith.cmpi ne, %33, %c0_i32_12 : i32
    scf.if %34 {
      %35 = tpu.iota {dimensions = array<i32: 0>} : vector<16x128xi32>
      %36 = vector.broadcast %26 : i32 to vector<16x128xi32>
      %37 = arith.addi %36, %35 : vector<16x128xi32>
      %c16_i32_13 = arith.constant 16 : i32
      %38 = vector.broadcast %c16_i32_13 : i32 to vector<16x128xi32>
      %39 = arith.cmpi slt, %37, %38 : vector<16x128xi32>
      %c0_14 = arith.constant 0 : index
      %c0_15 = arith.constant 0 : index
      %c0_16 = arith.constant 0 : index
      %c0_17 = arith.constant 0 : index
      %40 = vector.load %arg4[%c0_14, %c0_15, %c0_16, %c0_17] : memref<1x3x8x128xf32, #tpu.memory_space<vmem>>, vector<1x1x8x128xf32>
      %41 = vector.shape_cast %40 : vector<1x1x8x128xf32> to vector<8x128xf32>
      %cst_18 = arith.constant 0.000000e+00 : f32
      %42 = vector.broadcast %cst_18 : f32 to vector<16x128xf32>
      %43 = arith.select %39, %16, %42 : vector<16x128xi1>, vector<16x128xf32>
      %44 = vector.shape_cast %43 : vector<16x128xf32> to vector<2x8x128xf32>
      %cst_19 = arith.constant dense<0.000000e+00> : vector<8x128xf32>
      %45 = vector.multi_reduction <add>, %44, %cst_19 [0] : vector<2x8x128xf32> to vector<8x128xf32>
      %46 = arith.addf %41, %45 : vector<8x128xf32>
      %c0_20 = arith.constant 0 : index
      %c0_21 = arith.constant 0 : index
      %c0_22 = arith.constant 0 : index
      %c0_23 = arith.constant 0 : index
      %47 = vector.load %arg4[%c0_20, %c0_21, %c0_22, %c0_23] : memref<1x3x8x128xf32, #tpu.memory_space<vmem>>, vector<1x1x8x128xf32>
      %48 = vector.shape_cast %47 : vector<1x1x8x128xf32> to vector<8x128xf32>
      %49 = vector.shape_cast %46 : vector<8x128xf32> to vector<1x1x8x128xf32>
      tpu.vector_store %arg4[%c0_20, %c0_21, %c0_22, %c0_23], %49 {strides = array<i32>} : memref<1x3x8x128xf32, #tpu.memory_space<vmem>>, vector<1x1x8x128xf32>,
      %c0_24 = arith.constant 0 : index
      %c1 = arith.constant 1 : index
      %c0_25 = arith.constant 0 : index
      %c0_26 = arith.constant 0 : index
      %50 = vector.load %arg4[%c0_24, %c1, %c0_25, %c0_26] : memref<1x3x8x128xf32, #tpu.memory_space<vmem>>, vector<1x1x8x128xf32>
      %51 = vector.shape_cast %50 : vector<1x1x8x128xf32> to vector<8x128xf32>
      %cst_27 = arith.constant 0.000000e+00 : f32
      %52 = vector.broadcast %cst_27 : f32 to vector<16x128xf32>
      %53 = arith.select %39, %22, %52 : vector<16x128xi1>, vector<16x128xf32>
      %54 = vector.shape_cast %53 : vector<16x128xf32> to vector<2x8x128xf32>
      %cst_28 = arith.constant dense<0.000000e+00> : vector<8x128xf32>
      %55 = vector.multi_reduction <add>, %54, %cst_28 [0] : vector<2x8x128xf32> to vector<8x128xf32>
      %56 = arith.addf %51, %55 : vector<8x128xf32>
      %c0_29 = arith.constant 0 : index
      %c1_30 = arith.constant 1 : index
      %c0_31 = arith.constant 0 : index
      %c0_32 = arith.constant 0 : index
      %57 = vector.load %arg4[%c0_29, %c1_30, %c0_31, %c0_32] : memref<1x3x8x128xf32, #tpu.memory_space<vmem>>, vector<1x1x8x128xf32>
      %58 = vector.shape_cast %57 : vector<1x1x8x128xf32> to vector<8x128xf32>
      %59 = vector.shape_cast %56 : vector<8x128xf32> to vector<1x1x8x128xf32>
      tpu.vector_store %arg4[%c0_29, %c1_30, %c0_31, %c0_32], %59 {strides = array<i32>} : memref<1x3x8x128xf32, #tpu.memory_space<vmem>>, vector<1x1x8x128xf32>,
      %c0_33 = arith.constant 0 : index
      %c2 = arith.constant 2 : index
      %c0_34 = arith.constant 0 : index
      %c0_35 = arith.constant 0 : index
      %60 = vector.load %arg4[%c0_33, %c2, %c0_34, %c0_35] : memref<1x3x8x128xf32, #tpu.memory_space<vmem>>, vector<1x1x8x128xf32>
      %61 = vector.shape_cast %60 : vector<1x1x8x128xf32> to vector<8x128xf32>
      %cst_36 = arith.constant 0.000000e+00 : f32
      %62 = vector.broadcast %cst_36 : f32 to vector<16x128xf32>
      %63 = arith.select %39, %23, %62 : vector<16x128xi1>, vector<16x128xf32>
      %64 = vector.shape_cast %63 : vector<16x128xf32> to vector<2x8x128xf32>
      %cst_37 = arith.constant dense<0.000000e+00> : vector<8x128xf32>
      %65 = vector.multi_reduction <add>, %64, %cst_37 [0] : vector<2x8x128xf32> to vector<8x128xf32>
      %66 = arith.addf %61, %65 : vector<8x128xf32>
      %c0_38 = arith.constant 0 : index
      %c2_39 = arith.constant 2 : index
      %c0_40 = arith.constant 0 : index
      %c0_41 = arith.constant 0 : index
      %67 = vector.load %arg4[%c0_38, %c2_39, %c0_40, %c0_41] : memref<1x3x8x128xf32, #tpu.memory_space<vmem>>, vector<1x1x8x128xf32>
      %68 = vector.shape_cast %67 : vector<1x1x8x128xf32> to vector<8x128xf32>
      %69 = vector.shape_cast %66 : vector<8x128xf32> to vector<1x1x8x128xf32>
      tpu.vector_store %arg4[%c0_38, %c2_39, %c0_40, %c0_41], %69 {strides = array<i32>} : memref<1x3x8x128xf32, #tpu.memory_space<vmem>>, vector<1x1x8x128xf32>,
    } else {
    }
    return
  }
  func.func @transform_0(%arg0: i32, %arg1: i32) -> (i32, i32) {
    %c1_i32 = arith.constant 1 : i32
    %0 = arith.muli %arg0, %c1_i32 : i32
    %1 = arith.addi %0, %arg1 : i32
    %c0_i32 = arith.constant 0 : i32
    %2 = arith.minsi %1, %c0_i32 : i32
    %c0_i32_0 = arith.constant 0 : i32
    %c0_i32_1 = arith.constant 0 : i32
    return %2, %c0_i32_0 : i32, i32
  }
  func.func @transform_1(%arg0: i32, %arg1: i32) -> (i32, i32) {
    %c1_i32 = arith.constant 1 : i32
    %0 = arith.muli %arg0, %c1_i32 : i32
    %1 = arith.addi %0, %arg1 : i32
    %c0_i32 = arith.constant 0 : i32
    %2 = arith.minsi %1, %c0_i32 : i32
    %c0_i32_0 = arith.constant 0 : i32
    %c0_i32_1 = arith.constant 0 : i32
    return %2, %c0_i32_0 : i32, i32
  }
  func.func @transform_2(%arg0: i32, %arg1: i32) -> (i32, i32, i32, i32) {
    %c0_i32 = arith.constant 0 : i32
    %c0_i32_0 = arith.constant 0 : i32
    %c0_i32_1 = arith.constant 0 : i32
    %c0_i32_2 = arith.constant 0 : i32
    return %arg0, %c0_i32, %c0_i32_0, %c0_i32_1 : i32, i32, i32, i32
  }
}

</mosaic_0001>

<llo_original>
// kernel: tpu_custom_call.1
$region0: #{tpu_custom_call.1}
  #allocation0 [shape = 'u32[]', space=smem, size = 0x4, offset = 0x4, fixed_abs, tag = 'smem constant byte address 0x4 - core index']
  #allocation1 [shape = 'u32[144,128]{1,0:T(1,128)}', space=vmem, size = 0x12000, scoped, tag = 'internal scratch']
  %s0 = inlined_call_operand.hbm [shape: f32[16,128], index: 0, kind: input, shape index: {}]
  %s1 = inlined_call_operand.hbm [shape: f32[16,128], index: 1, kind: input, shape index: {}]
  %s2 = inlined_call_operand.hbm [shape: f32[1,3,8,128], index: 2, kind: output, shape index: {}]
  %s3 = sld [smem:[#allocation0]]
  $region38: #{tpu_custom_call.1} parent=0
    _
  %s5 = ssub.s32 1, %s3
  %s6 = scalar_select 0, %s5, %s3
  $region1: #{tpu_custom_call.1} parent=0
    #allocation2 [shape = 'u8[8192]{0}', space=vmem, size = 0x2000, scoped, tag = 'input window, operand 0, single buffered']
    #allocation3 [shape = 's32[1]{0}', space=sflag, size = 0x4, scoped, tag = 'scoped memory for tpu_custom_call.1']
    #allocation4 [shape = 's32[1]{0}', space=sflag, size = 0x4, scoped, tag = 'scoped memory for tpu_custom_call.1']
    #allocation5 [shape = 'u8[8192]{0}', space=vmem, size = 0x2000, scoped, tag = 'input window, operand 1, single buffered']
    #allocation6 [shape = 's32[1]{0}', space=sflag, size = 0x4, scoped, tag = 'scoped memory for tpu_custom_call.1']
    #allocation7 [shape = 'u8[12288]{0}', space=vmem, size = 0x3000, scoped, tag = 'output window, operand 0, single buffered']
    %7 = vsyncpa [#allocation3], 0
    %8 = vsyncpa [#allocation6], 0
    %9 = vsyncpa [#allocation4], 0
    // Predicated region
    $region2: #{tpu_custom_call.1} parent=1 // pred_check
      _
    $region3: #{tpu_custom_call.1} parent=1 // pred_check_branch
      %11 = sbr.rel (0) target = $region5
    $region4: #{tpu_custom_call.1} parent=1 // pred_region
      %s12 = sadd.s32 0, 0
      %p13 = scmp.lt.s32.totalorder %s12, 0
      %s14 = scalar_select %p13, %s12, 0
      %s15 = smul.u32 2, %s14
      %s17 = ssub.s32 256, 256
      %18 = vsyncadd [#allocation3], %s17
      %s19 = smul.addr %s15, 128
      %s20 = scalar_lea.hbm %s0, %s19
      %s21 = sshll.u32 [#allocation2], 4
      %s22 = int_to_ptr.vmem [resolvable:$true] %s21
      %27 = dma.hbm_to_vmem [thread:$0]  %s20, 256, %s22, [#allocation3], 128, 128, 8
    $region5: #{tpu_custom_call.1} parent=1 // pred_fallthru
      _
    // Predicated region
    $region6: #{tpu_custom_call.1} parent=1 // pred_check
      _
    $region7: #{tpu_custom_call.1} parent=1 // pred_check_branch
      %29 = sbr.rel (0) target = $region9
    $region8: #{tpu_custom_call.1} parent=1 // pred_region
      %s30 = sadd.s32 0, 0
      %p31 = scmp.lt.s32.totalorder %s30, 0
      %s32 = scalar_select %p31, %s30, 0
      %s33 = smul.u32 2, %s32
      %s35 = ssub.s32 256, 256
      %36 = vsyncadd [#allocation6], %s35
      %s37 = smul.addr %s33, 128
      %s38 = scalar_lea.hbm %s1, %s37
      %s39 = sshll.u32 [#allocation5], 4
      %s40 = int_to_ptr.vmem [resolvable:$true] %s39
      %45 = dma.hbm_to_vmem [thread:$0]  %s38, 256, %s40, [#allocation6], 128, 128, 8
    $region9: #{tpu_custom_call.1} parent=1 // pred_fallthru
      _
    // Predicated region
    $region10: #{tpu_custom_call.1} parent=1 // pred_check
      _
    $region11: #{tpu_custom_call.1} parent=1 // pred_check_branch
      %47 = sbr.rel (0) target = $region13
    $region12: #{tpu_custom_call.1} parent=1 // pred_region
      %48 = dma.done [#allocation3], 256
    $region13: #{tpu_custom_call.1} parent=1 // pred_fallthru
      _
    // Predicated region
    $region14: #{tpu_custom_call.1} parent=1 // pred_check
      _
    $region15: #{tpu_custom_call.1} parent=1 // pred_check_branch
      %50 = sbr.rel (0) target = $region17
    $region16: #{tpu_custom_call.1} parent=1 // pred_region
      %51 = dma.done [#allocation6], 256
    $region17: #{tpu_custom_call.1} parent=1 // pred_fallthru
      _
    %s52 = sadd.s32 0, 0
    %p53 = scmp.lt.s32.totalorder %s52, 0
    %s54 = scalar_select %p53, %s52, 0
    %s55 = smul.u32 2, %s54
    %s56 = sadd.s32 0, 0
    %p57 = scmp.lt.s32.totalorder %s56, 0
    %s58 = scalar_select %p57, %s56, 0
    %s59 = smul.u32 2, %s58
    %p60 = scmp.eq.s32.totalorder 0, 0
    // Predicated region
    $region18: #{tpu_custom_call.1} parent=1 // pred_check
      %p61 = pneg %p60
    $region19: #{tpu_custom_call.1} parent=1 // pred_check_branch
      %63 = sbr.rel (%p61) target = $region21
    $region20: #{tpu_custom_call.1} parent=1 // pred_region
      %64 = vst [vmem:[#allocation7] sm:$0xff] 0.0
      %65 = vst [vmem:[#allocation7 + $0x8] sm:$0xff] 0.0
      %66 = vst [vmem:[#allocation7 + $0x10] sm:$0xff] 0.0
    $region21: #{tpu_custom_call.1} parent=1 // pred_fallthru
      _
    %v67 = vld [vmem:[#allocation2] sm:$0xff]
    %v68 = vld [vmem:[#allocation2 + $0x8] sm:$0xff]
    %v69 = vld [vmem:[#allocation5] sm:$0xff]
    %v70 = vld [vmem:[#allocation5 + $0x8] sm:$0xff]
    %v71 = vand.u32 2147483647, %v67
    %v72 = vand.u32 2147483647, %v68
    %v73 = vsub.f32 0.0, %v71
    %v74 = vsub.f32 0.0, %v72
    %v75 = vmul.f32 %v73, 1.442695
    %v76 = vpow.pop %v75
    %v77 = vmul.f32 %v74, 1.442695
    %v78 = vpow.pop %v77
    %v79 = vadd.f32 %v76, 1.0
    %v80 = vadd.f32 %v78, 1.0
    %v81 = vmax.f32 %v67, 0.0
    %v82 = vmax.f32 %v68, 0.0
    %v83 = vmul.f32 %v67, %v69
    %v84 = vmul.f32 %v68, %v70
    %v85 = vsub.f32 %v81, %v83
    %v86 = vsub.f32 %v82, %v84
    %v87 = vlog2.pop %v79
    %v88 = vmul.f32 %v87, 0.6931472
    %v89 = vlog2.pop %v80
    %v90 = vmul.f32 %v89, 0.6931472
    %v91 = vadd.f32 %v85, %v88
    %v92 = vadd.f32 %v86, %v90
    %v93 = vrcp.pop %v79
    %v94 = vrcp.pop %v80
    %vm95 = vcmp.ge.f32.partialorder %v67, 0.0
    %vm96 = vcmp.ge.f32.partialorder %v68, 0.0
    %v97 = vmul.f32 %v76, %v93
    %v98 = vmul.f32 %v78, %v94
    %v99 = vsel %vm95, %v93, %v97
    %v100 = vsel %vm96, %v94, %v98
    %v101 = vmul.f32 %v99, %v69
    %v102 = vmul.f32 %v100, %v70
    %v103 = vadd.f32 %v99, %v69
    %v104 = vadd.f32 %v100, %v70
    %s105 = sadd.s32 0, 0
    %s106 = smul.u32 %s105, 16
    %s107 = sadd.s32 %s106, 16
    %p108 = scmp.le.s32.totalorder %s107, 16
    // Predicated region
    $region22: #{tpu_custom_call.1} parent=1 // pred_check
      %p109 = pneg %p108
    $region23: #{tpu_custom_call.1} parent=1 // pred_check_branch
      %111 = sbr.rel (%p109) target = $region25
    $region24: #{tpu_custom_call.1} parent=1 // pred_region
      %v112 = vld [vmem:[#allocation7] sm:$0xff]
      %v113 = vadd.f32 %v91, %v92
      %v114 = vadd.f32 %v112, %v113
      %115 = vst [vmem:[#allocation7] sm:$0xff] %v114
      %s116 = scalar_lea.vmem [#allocation7], 8
      %v117 = vld [vmem:[%s116] sm:$0xff]
      %v118 = vadd.f32 %v101, %v102
      %v119 = vadd.f32 %v117, %v118
      %120 = vst [vmem:[%s116] sm:$0xff] %v119
      %s121 = scalar_lea.vmem [#allocation7], 16
      %v122 = vld [vmem:[%s121] sm:$0xff]
      %v123 = vadd.f32 %v103, %v104
      %v124 = vadd.f32 %v122, %v123
      %125 = vst [vmem:[%s121] sm:$0xff] %v124
    $region25: #{tpu_custom_call.1} parent=1 // pred_fallthru
      _
    %p126 = scmp.gt.s32.totalorder %s107, 16
    // Predicated region
    $region26: #{tpu_custom_call.1} parent=1 // pred_check
      %p127 = pneg %p126
    $region27: #{tpu_custom_call.1} parent=1 // pred_check_branch
      %129 = sbr.rel (%p127) target = $region29
    $region28: #{tpu_custom_call.1} parent=1 // pred_region
      %v130 = vlaneseq
      %v131 = vshrl.u32 %v130, 7
      %v132 = vadd.s32 %v131, 8
      %v133 = vstv %s106
      %v134 = vadd.s32 %v133, %v131
      %v135 = vadd.s32 %v133, %v132
      %vm136 = vcmp.lt.s32.totalorder %v134, 16
      %vm137 = vcmp.lt.s32.totalorder %v135, 16
      %v138 = vld [vmem:[#allocation7] sm:$0xff]
      %v139 = vsel %vm136, %v91, 0.0
      %v140 = vsel %vm137, %v92, 0.0
      %v141 = vadd.f32 %v139, %v140
      %v142 = vadd.f32 %v138, %v141
      %143 = vst [vmem:[#allocation7] sm:$0xff] %v142
      %s144 = scalar_lea.vmem [#allocation7], 8
      %v145 = vld [vmem:[%s144] sm:$0xff]
      %v146 = vsel %vm136, %v101, 0.0
      %v147 = vsel %vm137, %v102, 0.0
      %v148 = vadd.f32 %v146, %v147
      %v149 = vadd.f32 %v145, %v148
      %150 = vst [vmem:[%s144] sm:$0xff] %v149
      %s151 = scalar_lea.vmem [#allocation7], 16
      %v152 = vld [vmem:[%s151] sm:$0xff]
      %v153 = vsel %vm136, %v103, 0.0
      %v154 = vsel %vm137, %v104, 0.0
      %v155 = vadd.f32 %v153, %v154
      %v156 = vadd.f32 %v152, %v155
      %157 = vst [vmem:[%s151] sm:$0xff] %v156
    $region29: #{tpu_custom_call.1} parent=1 // pred_fallthru
      _
    // Predicated region
    $region30: #{tpu_custom_call.1} parent=1 // pred_check
      _
    $region31: #{tpu_custom_call.1} parent=1 // pred_check_branch
      %159 = sbr.rel (0) target = $region33
    $region32: #{tpu_custom_call.1} parent=1 // pred_region
      %s161 = ssub.s32 384, 384
      %162 = vsyncadd [#allocation4], %s161
      %s163 = sshll.u32 [#allocation7], 4
      %s164 = int_to_ptr.vmem [resolvable:$true] %s163
      %169 = dma.vmem_to_hbm [thread:$0]  %s164, 384, %s2, [#allocation4], 128, 128, 8
    $region33: #{tpu_custom_call.1} parent=1 // pred_fallthru
      _
    // Predicated region
    $region34: #{tpu_custom_call.1} parent=1 // pred_check
      _
    $region35: #{tpu_custom_call.1} parent=1 // pred_check_branch
      %171 = sbr.rel (0) target = $region37
    $region36: #{tpu_custom_call.1} parent=1 // pred_region
      %172 = dma.done [#allocation4], 384
    $region37: #{tpu_custom_call.1} parent=1 // pred_fallthru
      _
    %173 = vsyncpa [#allocation3], 1
    %174 = vsyncpa [#allocation6], 1
    %175 = vsyncpa [#allocation4], 1

</llo_original>
